<compile_context>
chip_gen: v7x
topology: tpu7x:2x2x1
jax: 0.10.0
libtpu: 0.0.40
codegen_flags: <defaults>
</compile_context>

<pallas_src>
import jax
import jax.numpy as jnp
from jax.experimental import pallas as pl
from jax.experimental.pallas import tpu as pltpu

# Small TPU-friendly synthetic hyperparameters consistent with the module
# (real model uses clip_embeddings_dim=1024, cross_attention_dim=1024).
CLIP_EMBEDDINGS_DIM = 256      # clip_embeddings_dim (in & hidden dim)
CROSS_ATTENTION_DIM = 128      # cross_attention_dim (output dim)
BATCH = 8                      # multiple of 8 sublanes
LN_EPS = 1e-5
_INV_SQRT2 = 0.7071067811865476


def _mlp_proj_kernel(x_ref, w1_ref, b1_ref, w2_ref, b2_ref,
                     gamma_ref, beta_ref, o_ref):
    """Fused Linear -> GELU -> Linear -> LayerNorm, fully VMEM-resident.

    x_ref:     (B, D_in)      f32   (cast to bf16 in vregs)
    w1_ref:    (D_in, D_in)   bf16  K-major (already transposed)
    b1_ref:    (1, D_in)      f32
    w2_ref:    (D_in, D_out)  bf16  K-major (already transposed)
    b2_ref:    (1, D_out)     f32
    gamma_ref: (1, D_out)     f32
    beta_ref:  (1, D_out)     f32
    o_ref:     (B, D_out)     f32
    """
    # Linear 1: bf16 operands on the MXU, f32 accumulation.
    x_bf = x_ref[...].astype(jnp.bfloat16)
    h = jnp.dot(x_bf, w1_ref[...],
                preferred_element_type=jnp.float32) + b1_ref[...]

    # Exact (erf) GELU in f32 -- matches torch.nn.GELU() default.
    h = h * 0.5 * (1.0 + jax.lax.erf(h * _INV_SQRT2))

    # Linear 2: activations back to bf16 for the MXU, accumulate in f32.
    y = jnp.dot(h.astype(jnp.bfloat16), w2_ref[...],
                preferred_element_type=jnp.float32) + b2_ref[...]

    # LayerNorm over the last (lane) axis, fully in f32.
    mean = jnp.mean(y, axis=-1, keepdims=True)
    centered = y - mean
    var = jnp.mean(centered * centered, axis=-1, keepdims=True)
    y_norm = centered * jax.lax.rsqrt(var + LN_EPS)
    o_ref[...] = (y_norm * gamma_ref[...] + beta_ref[...]).astype(o_ref.dtype)


def prepare_params(w1, b1, w2, b2, ln_gamma, ln_beta):
    """ONE-TIME weight prep (run at load time, NOT per call).

    Torch layouts in: w1 (D_in, D_in), w2 (D_out, D_in), 1-D biases / LN params.
    Out: bf16, K-major weights and (1, D) f32 vectors -- the hot path below
    emits no per-call converts/reshapes/transposes.
    """
    d_in = w1.shape[1]
    d_out = w2.shape[0]
    return dict(
        w1=jnp.asarray(w1, jnp.float32).T.astype(jnp.bfloat16),        # (D_in, D_in)
        b1=jnp.asarray(b1, jnp.float32).reshape(1, d_in),
        w2=jnp.asarray(w2, jnp.float32).T.astype(jnp.bfloat16),        # (D_in, D_out)
        b2=jnp.asarray(b2, jnp.float32).reshape(1, d_out),
        gamma=jnp.asarray(ln_gamma, jnp.float32).reshape(1, d_out),
        beta=jnp.asarray(ln_beta, jnp.float32).reshape(1, d_out),
    )


def mlp_proj_apply(params, image_embeds):
    """Hot path: (B, D_in) f32 -> (B, D_out) f32. Zero per-call wrapper HLO."""
    b, d_in = image_embeds.shape
    d_out = params["w2"].shape[1]

    # Explicit scoped-VMEM budget (v5e default is only 16 MiB; the whole
    # problem is one VMEM block, so size it from the actual footprint).
    footprint = (image_embeds.size * 4 + params["w1"].size * 2 +
                 params["w2"].size * 2 + b * d_out * 4 +
                 4 * (d_in + 3 * d_out) * 4)
    vmem_limit = int(min(max(4 * footprint, 8 * 1024 * 1024), 32 * 1024 * 1024))

    vmem = pl.BlockSpec(memory_space=pltpu.MemorySpace.VMEM)
    return pl.pallas_call(
        _mlp_proj_kernel,
        out_shape=jax.ShapeDtypeStruct((b, d_out), jnp.float32),
        in_specs=[vmem] * 7,      # no grid: whole problem is one VMEM block
        out_specs=vmem,
        compiler_params=pltpu.CompilerParams(vmem_limit_bytes=vmem_limit),
    )(image_embeds.astype(jnp.float32), params["w1"], params["b1"],
      params["w2"], params["b2"], params["gamma"], params["beta"])


def _reference(image_embeds, w1, b1, w2, b2, ln_gamma, ln_beta):
    h = image_embeds @ w1.T + b1
    h = h * 0.5 * (1.0 + jax.lax.erf(h * _INV_SQRT2))       # exact GELU
    y = h @ w2.T + b2
    mean = jnp.mean(y, axis=-1, keepdims=True)
    var = jnp.mean((y - mean) ** 2, axis=-1, keepdims=True)
    return (y - mean) / jnp.sqrt(var + LN_EPS) * ln_gamma + ln_beta


if __name__ == "__main__":
    key = jax.random.PRNGKey(0)
    k_x, k_w1, k_b1, k_w2, k_b2 = jax.random.split(key, 5)

    image_embeds = jax.random.normal(k_x, (BATCH, CLIP_EMBEDDINGS_DIM), jnp.float32)
    w1 = jax.random.normal(k_w1, (CLIP_EMBEDDINGS_DIM, CLIP_EMBEDDINGS_DIM),
                           jnp.float32) * 0.02
    b1 = jax.random.normal(k_b1, (CLIP_EMBEDDINGS_DIM,), jnp.float32) * 0.01
    w2 = jax.random.normal(k_w2, (CROSS_ATTENTION_DIM, CLIP_EMBEDDINGS_DIM),
                           jnp.float32) * 0.02
    b2 = jax.random.normal(k_b2, (CROSS_ATTENTION_DIM,), jnp.float32) * 0.01
    ln_gamma = jnp.ones((CROSS_ATTENTION_DIM,), jnp.float32)   # LayerNorm default weight
    ln_beta = jnp.zeros((CROSS_ATTENTION_DIM,), jnp.float32)   # LayerNorm default bias

    # One-time param prep (bf16 + pre-transposed weights), then the jitted
    # hot path is a single fused pallas_call with no per-call converts.
    params = prepare_params(w1, b1, w2, b2, ln_gamma, ln_beta)
    apply_fn = jax.jit(mlp_proj_apply)

    out = apply_fn(params, image_embeds)
    out = jax.block_until_ready(out)

    ref = _reference(image_embeds, w1, b1, w2, b2, ln_gamma, ln_beta)
    assert out.shape == (BATCH, CROSS_ATTENTION_DIM)
    # Tolerance loosened because matmul operands are bf16 (f32 accumulation).
    assert jnp.allclose(out, ref, atol=5e-2, rtol=5e-2), \
        float(jnp.max(jnp.abs(out - ref)))

    print("KERNEL_OK")
</pallas_src>

<mosaic_0001>
module attributes {stable_mosaic.version = 11 : i64} {
  func.func @_mlp_proj_kernel(%arg0: memref<8x256xf32, #tpu.memory_space<vmem>>, %arg1: memref<256x256xbf16, #tpu.memory_space<vmem>>, %arg2: memref<1x256xf32, #tpu.memory_space<vmem>>, %arg3: memref<256x128xbf16, #tpu.memory_space<vmem>>, %arg4: memref<1x128xf32, #tpu.memory_space<vmem>>, %arg5: memref<1x128xf32, #tpu.memory_space<vmem>>, %arg6: memref<1x128xf32, #tpu.memory_space<vmem>>, %arg7: memref<8x128xf32, #tpu.memory_space<vmem>>) attributes {dimension_semantics = [], scalar_prefetch = 0 : i64, scratch_operands = 0 : i64, tpu.core_type = #tpu.core_type<tc>} {
    %c0 = arith.constant 0 : index
    %c0_0 = arith.constant 0 : index
    %0 = vector.load %arg0[%c0, %c0_0] : memref<8x256xf32, #tpu.memory_space<vmem>>, vector<8x256xf32>
    %1 = arith.truncf %0 : vector<8x256xf32> to vector<8x256xbf16>
    %c0_1 = arith.constant 0 : index
    %c0_2 = arith.constant 0 : index
    %2 = vector.load %arg1[%c0_1, %c0_2] : memref<256x256xbf16, #tpu.memory_space<vmem>>, vector<256x256xbf16>
    %cst = arith.constant dense<0.000000e+00> : vector<8x256xf32>
    %3 = tpu.matmul %1, %2, %cst {dimension_numbers = #tpu.dot_dimension_numbers<[1], [0], [0], [1], [0, 0, 1, 1], [], []>} : vector<8x256xbf16>, vector<256x256xbf16>, vector<8x256xf32> -> vector<8x256xf32>
    %c0_3 = arith.constant 0 : index
    %c0_4 = arith.constant 0 : index
    %4 = vector.load %arg2[%c0_3, %c0_4] : memref<1x256xf32, #tpu.memory_space<vmem>>, vector<1x256xf32>
    %5 = vector.broadcast %4 : vector<1x256xf32> to vector<8x256xf32>
    %6 = arith.addf %3, %5 : vector<8x256xf32>
    %cst_5 = arith.constant 5.000000e-01 : f32
    %7 = vector.broadcast %cst_5 : f32 to vector<8x256xf32>
    %8 = arith.mulf %6, %7 : vector<8x256xf32>
    %cst_6 = arith.constant 0.707106769 : f32
    %9 = vector.broadcast %cst_6 : f32 to vector<8x256xf32>
    %10 = arith.mulf %6, %9 : vector<8x256xf32>
    %11 = math.erf %10 : vector<8x256xf32>
    %cst_7 = arith.constant 1.000000e+00 : f32
    %12 = vector.broadcast %cst_7 : f32 to vector<8x256xf32>
    %13 = arith.addf %12, %11 : vector<8x256xf32>
    %14 = arith.mulf %8, %13 : vector<8x256xf32>
    %15 = arith.truncf %14 : vector<8x256xf32> to vector<8x256xbf16>
    %c0_8 = arith.constant 0 : index
    %c0_9 = arith.constant 0 : index
    %16 = vector.load %arg3[%c0_8, %c0_9] : memref<256x128xbf16, #tpu.memory_space<vmem>>, vector<256x128xbf16>
    %cst_10 = arith.constant dense<0.000000e+00> : vector<8x128xf32>
    %17 = tpu.matmul %15, %16, %cst_10 {dimension_numbers = #tpu.dot_dimension_numbers<[1], [0], [0], [1], [0, 0, 1, 1], [], []>} : vector<8x256xbf16>, vector<256x128xbf16>, vector<8x128xf32> -> vector<8x128xf32>
    %c0_11 = arith.constant 0 : index
    %c0_12 = arith.constant 0 : index
    %18 = vector.load %arg4[%c0_11, %c0_12] : memref<1x128xf32, #tpu.memory_space<vmem>>, vector<1x128xf32>
    %19 = vector.broadcast %18 : vector<1x128xf32> to vector<8x128xf32>
    %20 = arith.addf %17, %19 : vector<8x128xf32>
    %cst_13 = arith.constant dense<0.000000e+00> : vector<8xf32>
    %21 = vector.multi_reduction <add>, %20, %cst_13 [1] : vector<8x128xf32> to vector<8xf32>
    %22 = vector.shape_cast %21 : vector<8xf32> to vector<8x1xf32>
    %cst_14 = arith.constant 1.280000e+02 : f32
    %23 = vector.broadcast %cst_14 : f32 to vector<8x1xf32>
    %24 = arith.divf %22, %23 : vector<8x1xf32>
    %25 = vector.broadcast %24 : vector<8x1xf32> to vector<8x128xf32>
    %26 = arith.subf %20, %25 : vector<8x128xf32>
    %27 = arith.mulf %26, %26 : vector<8x128xf32>
    %cst_15 = arith.constant dense<0.000000e+00> : vector<8xf32>
    %28 = vector.multi_reduction <add>, %27, %cst_15 [1] : vector<8x128xf32> to vector<8xf32>
    %29 = vector.shape_cast %28 : vector<8xf32> to vector<8x1xf32>
    %cst_16 = arith.constant 1.280000e+02 : f32
    %30 = vector.broadcast %cst_16 : f32 to vector<8x1xf32>
    %31 = arith.divf %29, %30 : vector<8x1xf32>
    %cst_17 = arith.constant 9.99999974E-6 : f32
    %32 = vector.broadcast %cst_17 : f32 to vector<8x1xf32>
    %33 = arith.addf %31, %32 : vector<8x1xf32>
    %34 = math.rsqrt %33 : vector<8x1xf32>
    %35 = vector.broadcast %34 : vector<8x1xf32> to vector<8x128xf32>
    %36 = arith.mulf %26, %35 : vector<8x128xf32>
    %c0_18 = arith.constant 0 : index
    %c0_19 = arith.constant 0 : index
    %37 = vector.load %arg5[%c0_18, %c0_19] : memref<1x128xf32, #tpu.memory_space<vmem>>, vector<1x128xf32>
    %38 = vector.broadcast %37 : vector<1x128xf32> to vector<8x128xf32>
    %39 = arith.mulf %36, %38 : vector<8x128xf32>
    %c0_20 = arith.constant 0 : index
    %c0_21 = arith.constant 0 : index
    %40 = vector.load %arg6[%c0_20, %c0_21] : memref<1x128xf32, #tpu.memory_space<vmem>>, vector<1x128xf32>
    %41 = vector.broadcast %40 : vector<1x128xf32> to vector<8x128xf32>
    %42 = arith.addf %39, %41 : vector<8x128xf32>
    %c0_22 = arith.constant 0 : index
    %c0_23 = arith.constant 0 : index
    %43 = vector.load %arg7[%c0_22, %c0_23] : memref<8x128xf32, #tpu.memory_space<vmem>>, vector<8x128xf32>
    tpu.vector_store %arg7[%c0_22, %c0_23], %42 {strides = array<i32>} : memref<8x128xf32, #tpu.memory_space<vmem>>, vector<8x128xf32>,
    return
  }
}

</mosaic_0001>

<llo_original>
// kernel: mlp_proj_apply.1
$region0: #{mlp_proj_apply.1}
  #allocation0 [shape = 'u32[]', space=smem, size = 0x4, offset = 0x4, fixed_abs, tag = 'smem constant byte address 0x4 - core index']
  #allocation1 [shape = 'u32[144,128]{1,0:T(1,128)}', space=vmem, size = 0x12000, scoped, tag = 'internal scratch']
  %s0 = inlined_call_operand.vmem [shape: f32[8,256], index: 0, kind: input, shape index: {}]
  %s1 = inlined_call_operand.hbm [shape: bf16[256,256], index: 1, kind: input, shape index: {}]
  %s2 = inlined_call_operand.hbm [shape: f32[1,256], index: 2, kind: input, shape index: {}]
  %s3 = inlined_call_operand.hbm [shape: bf16[256,128], index: 3, kind: input, shape index: {}]
  %s4 = inlined_call_operand.vmem [shape: f32[1,128], index: 4, kind: input, shape index: {}]
  %s5 = inlined_call_operand.vmem [shape: f32[1,128], index: 5, kind: input, shape index: {}]
  %s6 = inlined_call_operand.vmem [shape: f32[1,128], index: 6, kind: input, shape index: {}]
  %s7 = inlined_call_operand.hbm [shape: f32[8,128], index: 7, kind: output, shape index: {}]
  %s8 = sld [smem:[#allocation0]]
  $region50: #{mlp_proj_apply.1} parent=0
    _
  %s10 = ssub.s32 1, %s8
  %s11 = scalar_select 0, %s10, %s8
  $region1: #{mlp_proj_apply.1} parent=0
    #allocation2 [shape = 'u8[131072]{0}', space=vmem, size = 0x20000, scoped, tag = 'input window, operand 1, single buffered']
    #allocation3 [shape = 's32[1]{0}', space=sflag, size = 0x4, scoped, tag = 'scoped memory for mlp_proj_apply.1']
    #allocation4 [shape = 's32[1]{0}', space=sflag, size = 0x4, scoped, tag = 'scoped memory for mlp_proj_apply.1']
    #allocation5 [shape = 'u8[1024]{0}', space=vmem, size = 0x400, scoped, tag = 'input window, operand 2, single buffered']
    #allocation6 [shape = 's32[1]{0}', space=sflag, size = 0x4, scoped, tag = 'scoped memory for mlp_proj_apply.1']
    #allocation7 [shape = 'u8[65536]{0}', space=vmem, size = 0x10000, scoped, tag = 'input window, operand 3, single buffered']
    #allocation8 [shape = 'u8[4096]{0}', space=vmem, size = 0x1000, scoped, tag = 'output window, operand 0, single buffered']
    %12 = vsyncpa [#allocation3], 0
    %13 = vsyncpa [#allocation6], 0
    %14 = vsyncpa [#allocation4], 0
    // Predicated region
    $region2: #{mlp_proj_apply.1} parent=1 // pred_check
      _
    $region3: #{mlp_proj_apply.1} parent=1 // pred_check_branch
      %16 = sbr.rel (0) target = $region5
    $region4: #{mlp_proj_apply.1} parent=1 // pred_region
      _
    $region5: #{mlp_proj_apply.1} parent=1 // pred_fallthru
      _
    // Predicated region
    $region6: #{mlp_proj_apply.1} parent=1 // pred_check
      _
    $region7: #{mlp_proj_apply.1} parent=1 // pred_check_branch
      %18 = sbr.rel (0) target = $region9
    $region8: #{mlp_proj_apply.1} parent=1 // pred_region
      %s20 = ssub.s32 4096, 4096
      %21 = vsyncadd [#allocation3], %s20
      %s22 = sshll.u32 [#allocation2], 4
      %s23 = int_to_ptr.vmem [resolvable:$true] %s22
      %28 = dma.hbm_to_vmem [thread:$0]  %s1, 4096, %s23, [#allocation3], 128, 128, 8
    $region9: #{mlp_proj_apply.1} parent=1 // pred_fallthru
      _
    // Predicated region
    $region10: #{mlp_proj_apply.1} parent=1 // pred_check
      _
    $region11: #{mlp_proj_apply.1} parent=1 // pred_check_branch
      %30 = sbr.rel (0) target = $region13
    $region12: #{mlp_proj_apply.1} parent=1 // pred_region
      %s32 = ssub.s32 32, 32
      %33 = vsyncadd [#allocation6], %s32
      %s35 = sshll.u32 [#allocation5], 4
      %s36 = int_to_ptr.vmem [resolvable:$true] %s35
      %38 = dma.hbm_to_vmem [thread:$0]  %s2, 32, %s36, [#allocation6]
    $region13: #{mlp_proj_apply.1} parent=1 // pred_fallthru
      _
    // Predicated region
    $region14: #{mlp_proj_apply.1} parent=1 // pred_check
      _
    $region15: #{mlp_proj_apply.1} parent=1 // pred_check_branch
      %40 = sbr.rel (0) target = $region17
    $region16: #{mlp_proj_apply.1} parent=1 // pred_region
      %s42 = ssub.s32 2048, 2048
      %43 = vsyncadd [#allocation6], %s42
      %s44 = sshll.u32 [#allocation7], 4
      %s45 = int_to_ptr.vmem [resolvable:$true] %s44
      %50 = dma.hbm_to_vmem [thread:$0]  %s3, 2048, %s45, [#allocation6], 64, 64, 4
    $region17: #{mlp_proj_apply.1} parent=1 // pred_fallthru
      _
    // Predicated region
    $region18: #{mlp_proj_apply.1} parent=1 // pred_check
      _
    $region19: #{mlp_proj_apply.1} parent=1 // pred_check_branch
      %52 = sbr.rel (0) target = $region21
    $region20: #{mlp_proj_apply.1} parent=1 // pred_region
      _
    $region21: #{mlp_proj_apply.1} parent=1 // pred_fallthru
      _
    // Predicated region
    $region22: #{mlp_proj_apply.1} parent=1 // pred_check
      _
    $region23: #{mlp_proj_apply.1} parent=1 // pred_check_branch
      %54 = sbr.rel (0) target = $region25
    $region24: #{mlp_proj_apply.1} parent=1 // pred_region
      _
    $region25: #{mlp_proj_apply.1} parent=1 // pred_fallthru
      _
    // Predicated region
    $region26: #{mlp_proj_apply.1} parent=1 // pred_check
      _
    $region27: #{mlp_proj_apply.1} parent=1 // pred_check_branch
      %56 = sbr.rel (0) target = $region29
    $region28: #{mlp_proj_apply.1} parent=1 // pred_region
      _
    $region29: #{mlp_proj_apply.1} parent=1 // pred_fallthru
      _
    // Predicated region
    $region30: #{mlp_proj_apply.1} parent=1 // pred_check
      _
    $region31: #{mlp_proj_apply.1} parent=1 // pred_check_branch
      %58 = sbr.rel (0) target = $region33
    $region32: #{mlp_proj_apply.1} parent=1 // pred_region
      %59 = dma.done [#allocation3], 4096
    $region33: #{mlp_proj_apply.1} parent=1 // pred_fallthru
      _
    // Predicated region
    $region34: #{mlp_proj_apply.1} parent=1 // pred_check
      _
    $region35: #{mlp_proj_apply.1} parent=1 // pred_check_branch
      %61 = sbr.rel (0) target = $region37
    $region36: #{mlp_proj_apply.1} parent=1 // pred_region
      %62 = dma.done [#allocation6], 32
    $region37: #{mlp_proj_apply.1} parent=1 // pred_fallthru
      _
    // Predicated region
    $region38: #{mlp_proj_apply.1} parent=1 // pred_check
      _
    $region39: #{mlp_proj_apply.1} parent=1 // pred_check_branch
      %64 = sbr.rel (0) target = $region41
    $region40: #{mlp_proj_apply.1} parent=1 // pred_region
      %65 = dma.done [#allocation6], 2048
    $region41: #{mlp_proj_apply.1} parent=1 // pred_fallthru
      _
    %v67 = vld [vmem:[%s0] sm:$0xff]
    %v68 = vld [vmem:[%s0 + $0x8] sm:$0xff]
    %v69 = vpack.c.bf16 %v67, %v67
    %v70 = vpack.c.bf16 %v68, %v68
    %v71 = vld [vmem:[#allocation2] sm:$0xff]
    %v72 = vld [vmem:[#allocation2 + $0x8] sm:$0xff]
    %v73 = vld [vmem:[#allocation2 + $0x10] sm:$0xff]
    %v74 = vld [vmem:[#allocation2 + $0x18] sm:$0xff]
    %v75 = vld [vmem:[#allocation2 + $0x20] sm:$0xff]
    %v76 = vld [vmem:[#allocation2 + $0x28] sm:$0xff]
    %v77 = vld [vmem:[#allocation2 + $0x30] sm:$0xff]
    %v78 = vld [vmem:[#allocation2 + $0x38] sm:$0xff]
    %v79 = vld [vmem:[#allocation2 + $0x40] sm:$0xff]
    %v80 = vld [vmem:[#allocation2 + $0x48] sm:$0xff]
    %v81 = vld [vmem:[#allocation2 + $0x50] sm:$0xff]
    %v82 = vld [vmem:[#allocation2 + $0x58] sm:$0xff]
    %v83 = vld [vmem:[#allocation2 + $0x60] sm:$0xff]
    %v84 = vld [vmem:[#allocation2 + $0x68] sm:$0xff]
    %v85 = vld [vmem:[#allocation2 + $0x70] sm:$0xff]
    %v86 = vld [vmem:[#allocation2 + $0x78] sm:$0xff]
    %v87 = vld [vmem:[#allocation2 + $0x80] sm:$0xff]
    %v88 = vld [vmem:[#allocation2 + $0x88] sm:$0xff]
    %v89 = vld [vmem:[#allocation2 + $0x90] sm:$0xff]
    %v90 = vld [vmem:[#allocation2 + $0x98] sm:$0xff]
    %v91 = vld [vmem:[#allocation2 + $0xa0] sm:$0xff]
    %v92 = vld [vmem:[#allocation2 + $0xa8] sm:$0xff]
    %v93 = vld [vmem:[#allocation2 + $0xb0] sm:$0xff]
    %v94 = vld [vmem:[#allocation2 + $0xb8] sm:$0xff]
    %v95 = vld [vmem:[#allocation2 + $0xc0] sm:$0xff]
    %v96 = vld [vmem:[#allocation2 + $0xc8] sm:$0xff]
    %v97 = vld [vmem:[#allocation2 + $0xd0] sm:$0xff]
    %v98 = vld [vmem:[#allocation2 + $0xd8] sm:$0xff]
    %v99 = vld [vmem:[#allocation2 + $0xe0] sm:$0xff]
    %v100 = vld [vmem:[#allocation2 + $0xe8] sm:$0xff]
    %v101 = vld [vmem:[#allocation2 + $0xf0] sm:$0xff]
    %v102 = vld [vmem:[#allocation2 + $0xf8] sm:$0xff]
    %v103 = vld [vmem:[#allocation5] sm:$0x3]
    %v105 = vlaneseq
    %v106 = vshrl.u32 %v105, 7
    %v107 = vsub.s32 0, %v106
    %v108 = vrot.slane %v103, %v107
    %v109 = vlaneseq
    %v110 = vshrl.u32 %v109, 7
    %v111 = vsub.s32 1, %v110
    %v112 = vrot.slane %v103, %v111
    %v147 = vunpack.c.l.b16 %v71
    %v148 = vunpack.c.h.b16 %v71
    %v149 = vunpack.c.l.b16 %v72
    %v150 = vunpack.c.h.b16 %v72
    %v151 = vunpack.c.l.b16 %v73
    %v152 = vunpack.c.h.b16 %v73
    %v153 = vunpack.c.l.b16 %v74
    %v154 = vunpack.c.h.b16 %v74
    %v155 = vunpack.c.l.b16 %v75
    %v156 = vunpack.c.h.b16 %v75
    %v157 = vunpack.c.l.b16 %v76
    %v158 = vunpack.c.h.b16 %v76
    %v159 = vunpack.c.l.b16 %v77
    %v160 = vunpack.c.h.b16 %v77
    %v161 = vunpack.c.l.b16 %v78
    %v162 = vunpack.c.h.b16 %v78
    %v163 = vunpack.c.l.b16 %v79
    %v164 = vunpack.c.h.b16 %v79
    %v165 = vunpack.c.l.b16 %v80
    %v166 = vunpack.c.h.b16 %v80
    %v167 = vunpack.c.l.b16 %v81
    %v168 = vunpack.c.h.b16 %v81
    %v169 = vunpack.c.l.b16 %v82
    %v170 = vunpack.c.h.b16 %v82
    %v171 = vunpack.c.l.b16 %v83
    %v172 = vunpack.c.h.b16 %v83
    %v173 = vunpack.c.l.b16 %v84
    %v174 = vunpack.c.h.b16 %v84
    %v175 = vunpack.c.l.b16 %v85
    %v176 = vunpack.c.h.b16 %v85
    %v177 = vunpack.c.l.b16 %v86
    %v178 = vunpack.c.h.b16 %v86
    %v179 = vunpack.c.l.b16 %v87
    %v180 = vunpack.c.h.b16 %v87
    %v181 = vunpack.c.l.b16 %v88
    %v182 = vunpack.c.h.b16 %v88
    %v183 = vunpack.c.l.b16 %v89
    %v184 = vunpack.c.h.b16 %v89
    %v185 = vunpack.c.l.b16 %v90
    %v186 = vunpack.c.h.b16 %v90
    %v187 = vunpack.c.l.b16 %v91
    %v188 = vunpack.c.h.b16 %v91
    %v189 = vunpack.c.l.b16 %v92
    %v190 = vunpack.c.h.b16 %v92
    %v191 = vunpack.c.l.b16 %v93
    %v192 = vunpack.c.h.b16 %v93
    %v193 = vunpack.c.l.b16 %v94
    %v194 = vunpack.c.h.b16 %v94
    %v195 = vunpack.c.l.b16 %v95
    %v196 = vunpack.c.h.b16 %v95
    %v197 = vunpack.c.l.b16 %v96
    %v198 = vunpack.c.h.b16 %v96
    %v199 = vunpack.c.l.b16 %v97
    %v200 = vunpack.c.h.b16 %v97
    %v201 = vunpack.c.l.b16 %v98
    %v202 = vunpack.c.h.b16 %v98
    %v203 = vunpack.c.l.b16 %v99
    %v204 = vunpack.c.h.b16 %v99
    %v205 = vunpack.c.l.b16 %v100
    %v206 = vunpack.c.h.b16 %v100
    %v207 = vunpack.c.l.b16 %v101
    %v208 = vunpack.c.h.b16 %v101
    %v209 = vunpack.c.l.b16 %v102
    %v210 = vunpack.c.h.b16 %v102
    %v211 = vpack.c.b16 %v149, %v147
    %v212 = vpack.c.b16 %v150, %v148
    %v213 = vpack.c.b16 %v153, %v151
    %v214 = vpack.c.b16 %v154, %v152
    %v215 = vpack.c.b16 %v157, %v155
    %v216 = vpack.c.b16 %v158, %v156
    %v217 = vpack.c.b16 %v161, %v159
    %v218 = vpack.c.b16 %v162, %v160
    %v219 = vpack.c.b16 %v165, %v163
    %v220 = vpack.c.b16 %v166, %v164
    %v221 = vpack.c.b16 %v169, %v167
    %v222 = vpack.c.b16 %v170, %v168
    %v223 = vpack.c.b16 %v173, %v171
    %v224 = vpack.c.b16 %v174, %v172
    %v225 = vpack.c.b16 %v177, %v175
    %v226 = vpack.c.b16 %v178, %v176
    %v227 = vpack.c.b16 %v181, %v179
    %v228 = vpack.c.b16 %v182, %v180
    %v229 = vpack.c.b16 %v185, %v183
    %v230 = vpack.c.b16 %v186, %v184
    %v231 = vpack.c.b16 %v189, %v187
    %v232 = vpack.c.b16 %v190, %v188
    %v233 = vpack.c.b16 %v193, %v191
    %v234 = vpack.c.b16 %v194, %v192
    %v235 = vpack.c.b16 %v197, %v195
    %v236 = vpack.c.b16 %v198, %v196
    %v237 = vpack.c.b16 %v201, %v199
    %v238 = vpack.c.b16 %v202, %v200
    %v239 = vpack.c.b16 %v205, %v203
    %v240 = vpack.c.b16 %v206, %v204
    %v241 = vpack.c.b16 %v209, %v207
    %v242 = vpack.c.b16 %v210, %v208
    %275 = vmatprep.subr.bf16.mxu0 %v212
    %276 = vmatpush1.bf16.msra.mxu0 %v211
    %277 = vmatprep.subr.bf16.mxu0 %v214
    %278 = vmatpush1.bf16.msra.mxu0 %v213
    %279 = vmatprep.subr.bf16.mxu0 %v216
    %280 = vmatpush1.bf16.msra.mxu0 %v215
    %281 = vmatprep.subr.bf16.mxu0 %v218
    %282 = vmatpush1.bf16.msra.mxu0 %v217
    %283 = vmatprep.subr.bf16.mxu0 %v220
    %284 = vmatpush1.bf16.msra.mxu0 %v219
    %285 = vmatprep.subr.bf16.mxu0 %v222
    %286 = vmatpush1.bf16.msra.mxu0 %v221
    %287 = vmatprep.subr.bf16.mxu0 %v224
    %288 = vmatpush1.bf16.msra.mxu0 %v223
    %289 = vmatprep.subr.bf16.mxu0 %v226
    %290 = vmatpush1.bf16.msra.mxu0 %v225
    %291 = vmatprep.subr.bf16.mxu0 %v228
    %292 = vmatpush1.bf16.msra.mxu0 %v227
    %293 = vmatprep.subr.bf16.mxu0 %v230
    %294 = vmatpush1.bf16.msra.mxu0 %v229
    %295 = vmatprep.subr.bf16.mxu0 %v232
    %296 = vmatpush1.bf16.msra.mxu0 %v231
    %297 = vmatprep.subr.bf16.mxu0 %v234
    %298 = vmatpush1.bf16.msra.mxu0 %v233
    %299 = vmatprep.subr.bf16.mxu0 %v236
    %300 = vmatpush1.bf16.msra.mxu0 %v235
    %301 = vmatprep.subr.bf16.mxu0 %v238
    %302 = vmatpush1.bf16.msra.mxu0 %v237
    %303 = vmatprep.subr.bf16.mxu0 %v240
    %304 = vmatpush1.bf16.msra.mxu0 %v239
    %305 = vmatprep.subr.bf16.mxu0 %v242
    %306 = vmatpush1.bf16.msra.mxu0 %v241
    %307 = vmatprep.mubr.bf16.mxu0 %v70
    %308 = vmatmul.mubr.bf16.gmra.mrb[0].mxu0 %v69
    %v309 = vpop.f32.mrb[0].mxu0
    %v310 = vadd.f32 %v108, %v309
    %v311 = vpop.f32.mrb[0].mxu0
    %v312 = vadd.f32 %v112, %v311
    %v313 = vpop.f32.mrb[0].mxu0
    %v314 = vpop.f32.mrb[0].mxu0
    %315 = vdwg.mxu0
    %v316 = vmul.f32 %v310, 0.5
    %v317 = vmul.f32 %v312, 0.5
    %v318 = vmul.f32 %v310, 0.70710677
    %v319 = vmul.f32 %v312, 0.70710677
    %v320 = verf.f32.pop %v318
    %v321 = verf.f32.pop %v319
    %v322 = vadd.f32 %v320, 1.0
    %v323 = vadd.f32 %v321, 1.0
    %v324 = vmul.f32 %v316, %v322
    %v325 = vmul.f32 %v317, %v323
    %v326 = vpack.c.bf16 %v324, %v324
    %v327 = vpack.c.bf16 %v325, %v325
    %v328 = vld [vmem:[#allocation7] sm:$0xf]
    %v329 = vld [vmem:[#allocation7 + $0x4] sm:$0xf]
    %v330 = vld [vmem:[#allocation7 + $0x8] sm:$0xf]
    %v331 = vld [vmem:[#allocation7 + $0xc] sm:$0xf]
    %v332 = vld [vmem:[#allocation7 + $0x10] sm:$0xf]
    %v333 = vld [vmem:[#allocation7 + $0x14] sm:$0xf]
    %v334 = vld [vmem:[#allocation7 + $0x18] sm:$0xf]
    %v335 = vld [vmem:[#allocation7 + $0x1c] sm:$0xf]
    %v336 = vld [vmem:[#allocation7 + $0x20] sm:$0xf]
    %v337 = vld [vmem:[#allocation7 + $0x24] sm:$0xf]
    %v338 = vld [vmem:[#allocation7 + $0x28] sm:$0xf]
    %v339 = vld [vmem:[#allocation7 + $0x2c] sm:$0xf]
    %v340 = vld [vmem:[#allocation7 + $0x30] sm:$0xf]
    %v341 = vld [vmem:[#allocation7 + $0x34] sm:$0xf]
    %v342 = vld [vmem:[#allocation7 + $0x38] sm:$0xf]
    %v343 = vld [vmem:[#allocation7 + $0x3c] sm:$0xf]
    %v344 = vld [vmem:[#allocation7 + $0x40] sm:$0xf]
    %v345 = vld [vmem:[#allocation7 + $0x44] sm:$0xf]
    %v346 = vld [vmem:[#allocation7 + $0x48] sm:$0xf]
    %v347 = vld [vmem:[#allocation7 + $0x4c] sm:$0xf]
    %v348 = vld [vmem:[#allocation7 + $0x50] sm:$0xf]
    %v349 = vld [vmem:[#allocation7 + $0x54] sm:$0xf]
    %v350 = vld [vmem:[#allocation7 + $0x58] sm:$0xf]
    %v351 = vld [vmem:[#allocation7 + $0x5c] sm:$0xf]
    %v352 = vld [vmem:[#allocation7 + $0x60] sm:$0xf]
    %v353 = vld [vmem:[#allocation7 + $0x64] sm:$0xf]
    %v354 = vld [vmem:[#allocation7 + $0x68] sm:$0xf]
    %v355 = vld [vmem:[#allocation7 + $0x6c] sm:$0xf]
    %v356 = vld [vmem:[#allocation7 + $0x70] sm:$0xf]
    %v357 = vld [vmem:[#allocation7 + $0x74] sm:$0xf]
    %v358 = vld [vmem:[#allocation7 + $0x78] sm:$0xf]
    %v359 = vld [vmem:[#allocation7 + $0x7c] sm:$0xf]
    %v360 = vld [vmem:[%s4] sm:$0x1]
    %v362 = vlaneseq
    %v363 = vshrl.u32 %v362, 7
    %v364 = vsub.s32 0, %v363
    %v365 = vrot.slane %v360, %v364
    %v399 = vunpack.c.l.b16 %v328
    %v400 = vunpack.c.l.b16 %v329
    %v401 = vunpack.c.l.b16 %v330
    %v402 = vunpack.c.l.b16 %v331
    %v403 = vunpack.c.l.b16 %v332
    %v404 = vunpack.c.l.b16 %v333
    %v405 = vunpack.c.l.b16 %v334
    %v406 = vunpack.c.l.b16 %v335
    %v407 = vunpack.c.l.b16 %v336
    %v408 = vunpack.c.l.b16 %v337
    %v409 = vunpack.c.l.b16 %v338
    %v410 = vunpack.c.l.b16 %v339
    %v411 = vunpack.c.l.b16 %v340
    %v412 = vunpack.c.l.b16 %v341
    %v413 = vunpack.c.l.b16 %v342
    %v414 = vunpack.c.l.b16 %v343
    %v415 = vunpack.c.l.b16 %v344
    %v416 = vunpack.c.l.b16 %v345
    %v417 = vunpack.c.l.b16 %v346
    %v418 = vunpack.c.l.b16 %v347
    %v419 = vunpack.c.l.b16 %v348
    %v420 = vunpack.c.l.b16 %v349
    %v421 = vunpack.c.l.b16 %v350
    %v422 = vunpack.c.l.b16 %v351
    %v423 = vunpack.c.l.b16 %v352
    %v424 = vunpack.c.l.b16 %v353
    %v425 = vunpack.c.l.b16 %v354
    %v426 = vunpack.c.l.b16 %v355
    %v427 = vunpack.c.l.b16 %v356
    %v428 = vunpack.c.l.b16 %v357
    %v429 = vunpack.c.l.b16 %v358
    %v430 = vunpack.c.l.b16 %v359
    %v431 = vpack.c.b16 %v400, %v399
    %v432 = vpack.c.b16 %v402, %v401
    %v433 = vpack.c.b16 %v404, %v403
    %v434 = vpack.c.b16 %v406, %v405
    %v435 = vpack.c.b16 %v408, %v407
    %v436 = vpack.c.b16 %v410, %v409
    %v437 = vpack.c.b16 %v412, %v411
    %v438 = vpack.c.b16 %v414, %v413
    %v439 = vpack.c.b16 %v416, %v415
    %v440 = vpack.c.b16 %v418, %v417
    %v441 = vpack.c.b16 %v420, %v419
    %v442 = vpack.c.b16 %v422, %v421
    %v443 = vpack.c.b16 %v424, %v423
    %v444 = vpack.c.b16 %v426, %v425
    %v445 = vpack.c.b16 %v428, %v427
    %v446 = vpack.c.b16 %v430, %v429
    %463 = vmatprep.subr.bf16.mxu0 0
    %464 = vmatpush1.bf16.msra.mxu0 %v431
    %465 = vmatprep.subr.bf16.mxu0 0
    %466 = vmatpush1.bf16.msra.mxu0 %v432
    %467 = vmatprep.subr.bf16.mxu0 0
    %468 = vmatpush1.bf16.msra.mxu0 %v433
    %469 = vmatprep.subr.bf16.mxu0 0
    %470 = vmatpush1.bf16.msra.mxu0 %v434
    %471 = vmatprep.subr.bf16.mxu0 0
    %472 = vmatpush1.bf16.msra.mxu0 %v435
    %473 = vmatprep.subr.bf16.mxu0 0
    %474 = vmatpush1.bf16.msra.mxu0 %v436
    %475 = vmatprep.subr.bf16.mxu0 0
    %476 = vmatpush1.bf16.msra.mxu0 %v437
    %477 = vmatprep.subr.bf16.mxu0 0
    %478 = vmatpush1.bf16.msra.mxu0 %v438
    %479 = vmatprep.subr.bf16.mxu0 0
    %480 = vmatpush1.bf16.msra.mxu0 %v439
    %481 = vmatprep.subr.bf16.mxu0 0
    %482 = vmatpush1.bf16.msra.mxu0 %v440
    %483 = vmatprep.subr.bf16.mxu0 0
    %484 = vmatpush1.bf16.msra.mxu0 %v441
    %485 = vmatprep.subr.bf16.mxu0 0
    %486 = vmatpush1.bf16.msra.mxu0 %v442
    %487 = vmatprep.subr.bf16.mxu0 0
    %488 = vmatpush1.bf16.msra.mxu0 %v443
    %489 = vmatprep.subr.bf16.mxu0 0
    %490 = vmatpush1.bf16.msra.mxu0 %v444
    %491 = vmatprep.subr.bf16.mxu0 0
    %492 = vmatpush1.bf16.msra.mxu0 %v445
    %493 = vmatprep.subr.bf16.mxu0 0
    %494 = vmatpush1.bf16.msra.mxu0 %v446
    %495 = vmatprep.mubr.bf16.mxu0 %v327
    %496 = vmatmul.mubr.bf16.gmra.mrb[0].mxu0 %v326
    %v497 = vpop.f32.mrb[0].mxu0
    %v498 = vadd.f32 %v365, %v497
    %v499 = vpop.f32.mrb[0].mxu0
    %v500 = vpop.f32.mrb[0].mxu0
    %v501 = vpop.f32.mrb[0].mxu0
    %502 = vdwg.mxu0
    %503 = vadd.xlane.f32.xlu0 %v498
    %v504 = vpop.xlane.xlu0 %503
    %v505 = vrcp.pop 128.0
    %v506 = vmul.f32 %v504, %v505
    %v507 = vsub.f32 %v498, %v506
    %v508 = vmul.f32 %v507, %v507
    %509 = vadd.xlane.f32.xlu0 %v508
    %v510 = vpop.xlane.xlu0 %509
    %v511 = vmul.f32 %v510, %v505
    %v512 = vadd.f32 %v511, 1e-05
    %v513 = vrsqrt.pop %v512
    %v514 = vmul.f32 %v507, %v513
    %v515 = vld [vmem:[%s5] sm:$0x1]
    %v517 = vlaneseq
    %v518 = vshrl.u32 %v517, 7
    %v519 = vsub.s32 0, %v518
    %v520 = vrot.slane %v515, %v519
    %v522 = vmul.f32 %v514, %v520
    %v523 = vld [vmem:[%s6] sm:$0x1]
    %v525 = vlaneseq
    %v526 = vshrl.u32 %v525, 7
    %v527 = vsub.s32 0, %v526
    %v528 = vrot.slane %v523, %v527
    %v530 = vadd.f32 %v522, %v528
    %531 = vst [vmem:[#allocation8] sm:$0xff] %v530
    // Predicated region
    $region42: #{mlp_proj_apply.1} parent=1 // pred_check
      _
    $region43: #{mlp_proj_apply.1} parent=1 // pred_check_branch
      %533 = sbr.rel (0) target = $region45
    $region44: #{mlp_proj_apply.1} parent=1 // pred_region
      %s535 = ssub.s32 128, 128
      %536 = vsyncadd [#allocation4], %s535
      %s538 = sshll.u32 [#allocation8], 4
      %s539 = int_to_ptr.vmem [resolvable:$true] %s538
      %541 = dma.vmem_to_hbm [thread:$0]  %s539, 128, %s7, [#allocation4]
    $region45: #{mlp_proj_apply.1} parent=1 // pred_fallthru
      _
    // Predicated region
    $region46: #{mlp_proj_apply.1} parent=1 // pred_check
      _
    $region47: #{mlp_proj_apply.1} parent=1 // pred_check_branch
      %543 = sbr.rel (0) target = $region49
    $region48: #{mlp_proj_apply.1} parent=1 // pred_region
      %544 = dma.done [#allocation4], 128
    $region49: #{mlp_proj_apply.1} parent=1 // pred_fallthru
      _
    %545 = vsyncpa [#allocation3], 1
    %546 = vsyncpa [#allocation6], 1
    %547 = vsyncpa [#allocation4], 1

</llo_original>
